<compile_context>
chip_gen: v7x
topology: tpu7x:2x2x1
jax: 0.10.0
libtpu: 0.0.40
codegen_flags: <defaults>
</compile_context>

<pallas_src>
import jax
import jax.numpy as jnp
from jax.experimental import pallas as pl
from jax.experimental.pallas import tpu as pltpu

# ----- small synthetic shapes consistent with the module ---------------------
BATCH = 2
SEQ = 8
D_MODEL = 32          # config.d_model
VOCAB = 64
NUM_LABELS = 2        # project_config.num_of_labels (content, wording)
EOS_TOKEN_ID = 2      # bart.config.eos_token_id
OUT_PAD = 128         # lane-dense padded head-output width (sliced outside)


def _vmem():
    # Full-array VMEM blocks: shapes here are tiny (<< 1 MiB total).
    # TODO(synk): for real BART sizes (S~1024, D~1024) add a grid over the
    # (B*S) row axis with "parallel" semantics and row tiles sized for v7x's
    # 64 MiB VMEM instead of full-array blocks.
    return pl.BlockSpec(memory_space=pltpu.MemorySpace.VMEM)


def _smem():
    return pl.BlockSpec(memory_space=pltpu.MemorySpace.SMEM)


# -----------------------------------------------------------------------------
# Fused kernel: twin dense+tanh (x2) -> last-<eos> row gather -> cat/reshape
# pairing -> LinearHead (dense -> tanh -> out_proj), single lane-dense store.
def fused_kernel(eos_idx_ref,                       # SMEM (2, B) int32
                 x_p_ref, x_a_ref,                  # VMEM (B, S, D) f32
                 w_p_ref, b_p_ref, w_a_ref, b_a_ref,
                 w1_ref, b1_ref, w2_ref, b2_ref,    # head (2D,2D),(1,2D),(2D,128),(1,128)
                 out_ref,                           # VMEM (B, OUT_PAD) f32
                 h_scratch):                        # VMEM (B*S, D) f32
    B, S, D = x_p_ref.shape

    def twin_hidden(x_ref, w_ref, b_ref):
        # TODO(synk): real pretrained BartModel stack substituted by one
        # dense+tanh layer over embedded tokens.
        x = x_ref[...].reshape(B * S, D).astype(jnp.bfloat16)
        w = w_ref[...].astype(jnp.bfloat16)
        return jnp.tanh(
            jnp.dot(x, w, preferred_element_type=jnp.float32) + b_ref[...]
        )

    def gather_last_eos_rows(twin_idx):
        # hidden_states[eos_mask].view(B, -1, D)[:, -1, :] == row at the LAST
        # <eos> position of each batch row: a scalar-indexed (1, D) gather.
        rows = []
        for b in range(B):
            src = b * S + eos_idx_ref[twin_idx, b]
            rows.append(h_scratch[pl.ds(src, 1), :])
        return rows

    # Prompt twin: hidden states -> scratch -> per-row gather (values).
    h_scratch[...] = twin_hidden(x_p_ref, w_p_ref, b_p_ref)
    prompt_rows = gather_last_eos_rows(0)
    # Answer twin reuses the scratch (prompt rows already read out as values).
    h_scratch[...] = twin_hidden(x_a_ref, w_a_ref, b_a_ref)
    answer_rows = gather_last_eos_rows(1)

    # torch.cat([prompt_rep, answer_rep]).reshape(batch_size, -1) semantics:
    # row b of the flattened input = concatenated cat-rows 2b and 2b+1.
    cat_rows = prompt_rows + answer_rows            # 2B rows of (1, D)
    flat = jnp.concatenate(
        [jnp.concatenate(cat_rows[2 * r:2 * r + 2], axis=1) for r in range(B)],
        axis=0,
    )                                               # (B, 2D)

    # LinearHead: dropout (identity at eval) -> dense -> tanh -> dropout
    # (identity) -> out_proj (padded to OUT_PAD lanes for a dense store).
    h1 = jnp.tanh(
        jnp.dot(flat.astype(jnp.bfloat16), w1_ref[...].astype(jnp.bfloat16),
                preferred_element_type=jnp.float32) + b1_ref[...]
    )
    out_ref[...] = (
        jnp.dot(h1.astype(jnp.bfloat16), w2_ref[...].astype(jnp.bfloat16),
                preferred_element_type=jnp.float32) + b2_ref[...]
    )


# -----------------------------------------------------------------------------
def _last_eos_idx(input_ids):
    S = input_ids.shape[1]
    pos = jnp.arange(S, dtype=jnp.int32)
    mask = input_ids == EOS_TOKEN_ID
    return jnp.max(jnp.where(mask, pos[None, :], -1), axis=1).astype(jnp.int32)


def validate_eos_counts(input_ids):
    """Host-side, outside jit: every row must have the same number of <eos>."""
    counts = jax.device_get((input_ids == EOS_TOKEN_ID).sum(axis=1))
    if len({int(c) for c in counts}) > 1:
        raise ValueError("All examples must have the same number of <eos> tokens.")


@jax.jit
def bart_twins_forward(params, prompt_input_ids, answer_input_ids):
    # TODO(synk): the pretrained BartModel twins are external modules; here the
    # embedding lookup stays as XLA glue and the dense+tanh stand-in runs in
    # the fused Pallas kernel.
    x_p = params["embed_p"][prompt_input_ids]
    x_a = params["embed_a"][answer_input_ids]
    eos_idx = jnp.stack(
        [_last_eos_idx(prompt_input_ids), _last_eos_idx(answer_input_ids)], axis=0
    )

    B, S, D = x_p.shape
    # Pad out_proj to OUT_PAD lanes so the kernel's only output store is
    # lane-dense; slice back to NUM_LABELS below.
    w2_pad = (
        jnp.zeros((2 * D, OUT_PAD), jnp.float32).at[:, :NUM_LABELS].set(params["w2"])
    )
    b2_pad = (
        jnp.zeros((1, OUT_PAD), jnp.float32).at[:, :NUM_LABELS].set(params["b2"])
    )

    logits_pad = pl.pallas_call(
        fused_kernel,
        out_shape=jax.ShapeDtypeStruct((B, OUT_PAD), jnp.float32),
        in_specs=[_smem()] + [_vmem()] * 10,
        out_specs=_vmem(),
        scratch_shapes=[pltpu.VMEM((B * S, D), jnp.float32)],
    )(
        eos_idx, x_p, x_a,
        params["w_p"], params["b_p"], params["w_a"], params["b_a"],
        params["w1"], params["b1"], w2_pad, b2_pad,
    )
    return logits_pad[:, :NUM_LABELS]


def init_params(key):
    ks = jax.random.split(key, 8)
    s = 0.02
    return {
        # synthetic twin "BART" stand-ins
        "embed_p": jax.random.normal(ks[0], (VOCAB, D_MODEL), jnp.float32) * s,
        "w_p": jax.random.normal(ks[1], (D_MODEL, D_MODEL), jnp.float32) * s,
        "b_p": jnp.zeros((1, D_MODEL), jnp.float32),
        "embed_a": jax.random.normal(ks[2], (VOCAB, D_MODEL), jnp.float32) * s,
        "w_a": jax.random.normal(ks[3], (D_MODEL, D_MODEL), jnp.float32) * s,
        "b_a": jnp.zeros((1, D_MODEL), jnp.float32),
        # LinearHead: input_dim = inner_dim = 2 * d_model, out = num_labels
        "w1": jax.random.normal(ks[4], (2 * D_MODEL, 2 * D_MODEL), jnp.float32) * s,
        "b1": jax.random.normal(ks[5], (1, 2 * D_MODEL), jnp.float32) * s,
        "w2": jax.random.normal(ks[6], (2 * D_MODEL, NUM_LABELS), jnp.float32) * s,
        "b2": jax.random.normal(ks[7], (1, NUM_LABELS), jnp.float32) * s,
    }


if __name__ == "__main__":
    key = jax.random.PRNGKey(0)
    pk, ak, wk = jax.random.split(key, 3)
    params = init_params(wk)

    # token ids in [3, VOCAB) so EOS_TOKEN_ID=2 appears only where we place it
    prompt_input_ids = jax.random.randint(pk, (BATCH, SEQ), 3, VOCAB, jnp.int32)
    answer_input_ids = jax.random.randint(ak, (BATCH, SEQ), 3, VOCAB, jnp.int32)
    # exactly one <eos> per row (same count across rows, positions may differ)
    prompt_input_ids = prompt_input_ids.at[0, 5].set(EOS_TOKEN_ID)
    prompt_input_ids = prompt_input_ids.at[1, 7].set(EOS_TOKEN_ID)
    answer_input_ids = answer_input_ids.at[:, SEQ - 1].set(EOS_TOKEN_ID)

    # Equal-<eos>-count validation: host-side, outside the jitted forward.
    validate_eos_counts(prompt_input_ids)
    validate_eos_counts(answer_input_ids)

    logits = bart_twins_forward(params, prompt_input_ids, answer_input_ids)
    logits = jax.block_until_ready(logits)
    assert logits.shape == (BATCH, NUM_LABELS)
    assert bool(jnp.all(jnp.isfinite(logits)))
    print("KERNEL_OK")
</pallas_src>

<mosaic_0001>
module attributes {stable_mosaic.version = 11 : i64} {
  func.func @fused_kernel(%arg0: memref<2x2xi32, #tpu.memory_space<smem>>, %arg1: memref<2x8x32xf32, #tpu.memory_space<vmem>>, %arg2: memref<2x8x32xf32, #tpu.memory_space<vmem>>, %arg3: memref<32x32xf32, #tpu.memory_space<vmem>>, %arg4: memref<1x32xf32, #tpu.memory_space<vmem>>, %arg5: memref<32x32xf32, #tpu.memory_space<vmem>>, %arg6: memref<1x32xf32, #tpu.memory_space<vmem>>, %arg7: memref<64x64xf32, #tpu.memory_space<vmem>>, %arg8: memref<1x64xf32, #tpu.memory_space<vmem>>, %arg9: memref<64x128xf32, #tpu.memory_space<vmem>>, %arg10: memref<1x128xf32, #tpu.memory_space<vmem>>, %arg11: memref<2x128xf32, #tpu.memory_space<vmem>>, %arg12: memref<16x32xf32, #tpu.memory_space<vmem>>) attributes {dimension_semantics = [], scalar_prefetch = 0 : i64, scratch_operands = 1 : i64, tpu.core_type = #tpu.core_type<tc>} {
    %c0 = arith.constant 0 : index
    %c0_0 = arith.constant 0 : index
    %c0_1 = arith.constant 0 : index
    %0 = vector.load %arg1[%c0, %c0_0, %c0_1] : memref<2x8x32xf32, #tpu.memory_space<vmem>>, vector<2x8x32xf32>
    %1 = vector.shape_cast %0 : vector<2x8x32xf32> to vector<16x32xf32>
    %2 = arith.truncf %1 : vector<16x32xf32> to vector<16x32xbf16>
    %c0_2 = arith.constant 0 : index
    %c0_3 = arith.constant 0 : index
    %3 = vector.load %arg3[%c0_2, %c0_3] : memref<32x32xf32, #tpu.memory_space<vmem>>, vector<32x32xf32>
    %4 = arith.truncf %3 : vector<32x32xf32> to vector<32x32xbf16>
    %cst = arith.constant dense<0.000000e+00> : vector<16x32xf32>
    %5 = tpu.matmul %2, %4, %cst {dimension_numbers = #tpu.dot_dimension_numbers<[1], [0], [0], [1], [0, 0, 1, 1], [], []>} : vector<16x32xbf16>, vector<32x32xbf16>, vector<16x32xf32> -> vector<16x32xf32>
    %c0_4 = arith.constant 0 : index
    %c0_5 = arith.constant 0 : index
    %6 = vector.load %arg4[%c0_4, %c0_5] : memref<1x32xf32, #tpu.memory_space<vmem>>, vector<1x32xf32>
    %7 = vector.broadcast %6 : vector<1x32xf32> to vector<16x32xf32>
    %8 = arith.addf %5, %7 : vector<16x32xf32>
    %9 = math.tanh %8 : vector<16x32xf32>
    %c0_6 = arith.constant 0 : index
    %c0_7 = arith.constant 0 : index
    %10 = vector.load %arg12[%c0_6, %c0_7] : memref<16x32xf32, #tpu.memory_space<vmem>>, vector<16x32xf32>
    tpu.vector_store %arg12[%c0_6, %c0_7], %9 {strides = array<i32>} : memref<16x32xf32, #tpu.memory_space<vmem>>, vector<16x32xf32>,
    %c0_8 = arith.constant 0 : index
    %c0_9 = arith.constant 0 : index
    %11 = memref.load %arg0[%c0_8, %c0_9] : memref<2x2xi32, #tpu.memory_space<smem>>
    %c0_i32 = arith.constant 0 : i32
    %12 = arith.addi %c0_i32, %11 : i32
    %13 = arith.index_cast %12 : i32 to index
    %c0_10 = arith.constant 0 : index
    %14 = vector.load %arg12[%13, %c0_10] : memref<16x32xf32, #tpu.memory_space<vmem>>, vector<1x32xf32>
    %c0_11 = arith.constant 0 : index
    %c1 = arith.constant 1 : index
    %15 = memref.load %arg0[%c0_11, %c1] : memref<2x2xi32, #tpu.memory_space<smem>>
    %c8_i32 = arith.constant 8 : i32
    %16 = arith.addi %c8_i32, %15 : i32
    %17 = arith.index_cast %16 : i32 to index
    %c0_12 = arith.constant 0 : index
    %18 = vector.load %arg12[%17, %c0_12] : memref<16x32xf32, #tpu.memory_space<vmem>>, vector<1x32xf32>
    %c0_13 = arith.constant 0 : index
    %c0_14 = arith.constant 0 : index
    %c0_15 = arith.constant 0 : index
    %19 = vector.load %arg2[%c0_13, %c0_14, %c0_15] : memref<2x8x32xf32, #tpu.memory_space<vmem>>, vector<2x8x32xf32>
    %20 = vector.shape_cast %19 : vector<2x8x32xf32> to vector<16x32xf32>
    %21 = arith.truncf %20 : vector<16x32xf32> to vector<16x32xbf16>
    %c0_16 = arith.constant 0 : index
    %c0_17 = arith.constant 0 : index
    %22 = vector.load %arg5[%c0_16, %c0_17] : memref<32x32xf32, #tpu.memory_space<vmem>>, vector<32x32xf32>
    %23 = arith.truncf %22 : vector<32x32xf32> to vector<32x32xbf16>
    %cst_18 = arith.constant dense<0.000000e+00> : vector<16x32xf32>
    %24 = tpu.matmul %21, %23, %cst_18 {dimension_numbers = #tpu.dot_dimension_numbers<[1], [0], [0], [1], [0, 0, 1, 1], [], []>} : vector<16x32xbf16>, vector<32x32xbf16>, vector<16x32xf32> -> vector<16x32xf32>
    %c0_19 = arith.constant 0 : index
    %c0_20 = arith.constant 0 : index
    %25 = vector.load %arg6[%c0_19, %c0_20] : memref<1x32xf32, #tpu.memory_space<vmem>>, vector<1x32xf32>
    %26 = vector.broadcast %25 : vector<1x32xf32> to vector<16x32xf32>
    %27 = arith.addf %24, %26 : vector<16x32xf32>
    %28 = math.tanh %27 : vector<16x32xf32>
    %c0_21 = arith.constant 0 : index
    %c0_22 = arith.constant 0 : index
    %29 = vector.load %arg12[%c0_21, %c0_22] : memref<16x32xf32, #tpu.memory_space<vmem>>, vector<16x32xf32>
    tpu.vector_store %arg12[%c0_21, %c0_22], %28 {strides = array<i32>} : memref<16x32xf32, #tpu.memory_space<vmem>>, vector<16x32xf32>,
    %c1_23 = arith.constant 1 : index
    %c0_24 = arith.constant 0 : index
    %30 = memref.load %arg0[%c1_23, %c0_24] : memref<2x2xi32, #tpu.memory_space<smem>>
    %c0_i32_25 = arith.constant 0 : i32
    %31 = arith.addi %c0_i32_25, %30 : i32
    %32 = arith.index_cast %31 : i32 to index
    %c0_26 = arith.constant 0 : index
    %33 = vector.load %arg12[%32, %c0_26] : memref<16x32xf32, #tpu.memory_space<vmem>>, vector<1x32xf32>
    %c1_27 = arith.constant 1 : index
    %c1_28 = arith.constant 1 : index
    %34 = memref.load %arg0[%c1_27, %c1_28] : memref<2x2xi32, #tpu.memory_space<smem>>
    %c8_i32_29 = arith.constant 8 : i32
    %35 = arith.addi %c8_i32_29, %34 : i32
    %36 = arith.index_cast %35 : i32 to index
    %c0_30 = arith.constant 0 : index
    %37 = vector.load %arg12[%36, %c0_30] : memref<16x32xf32, #tpu.memory_space<vmem>>, vector<1x32xf32>
    %38 = tpu.concatenate %14, %18 in 1 : vector<1x32xf32>, vector<1x32xf32> -> vector<1x64xf32>
    %39 = tpu.concatenate %33, %37 in 1 : vector<1x32xf32>, vector<1x32xf32> -> vector<1x64xf32>
    %40 = tpu.concatenate %38, %39 in 0 : vector<1x64xf32>, vector<1x64xf32> -> vector<2x64xf32>
    %41 = arith.truncf %40 : vector<2x64xf32> to vector<2x64xbf16>
    %c0_31 = arith.constant 0 : index
    %c0_32 = arith.constant 0 : index
    %42 = vector.load %arg7[%c0_31, %c0_32] : memref<64x64xf32, #tpu.memory_space<vmem>>, vector<64x64xf32>
    %43 = arith.truncf %42 : vector<64x64xf32> to vector<64x64xbf16>
    %cst_33 = arith.constant dense<0.000000e+00> : vector<2x64xf32>
    %44 = tpu.matmul %41, %43, %cst_33 {dimension_numbers = #tpu.dot_dimension_numbers<[1], [0], [0], [1], [0, 0, 1, 1], [], []>} : vector<2x64xbf16>, vector<64x64xbf16>, vector<2x64xf32> -> vector<2x64xf32>
    %c0_34 = arith.constant 0 : index
    %c0_35 = arith.constant 0 : index
    %45 = vector.load %arg8[%c0_34, %c0_35] : memref<1x64xf32, #tpu.memory_space<vmem>>, vector<1x64xf32>
    %46 = vector.broadcast %45 : vector<1x64xf32> to vector<2x64xf32>
    %47 = arith.addf %44, %46 : vector<2x64xf32>
    %48 = math.tanh %47 : vector<2x64xf32>
    %49 = arith.truncf %48 : vector<2x64xf32> to vector<2x64xbf16>
    %c0_36 = arith.constant 0 : index
    %c0_37 = arith.constant 0 : index
    %50 = vector.load %arg9[%c0_36, %c0_37] : memref<64x128xf32, #tpu.memory_space<vmem>>, vector<64x128xf32>
    %51 = arith.truncf %50 : vector<64x128xf32> to vector<64x128xbf16>
    %cst_38 = arith.constant dense<0.000000e+00> : vector<2x128xf32>
    %52 = tpu.matmul %49, %51, %cst_38 {dimension_numbers = #tpu.dot_dimension_numbers<[1], [0], [0], [1], [0, 0, 1, 1], [], []>} : vector<2x64xbf16>, vector<64x128xbf16>, vector<2x128xf32> -> vector<2x128xf32>
    %c0_39 = arith.constant 0 : index
    %c0_40 = arith.constant 0 : index
    %53 = vector.load %arg10[%c0_39, %c0_40] : memref<1x128xf32, #tpu.memory_space<vmem>>, vector<1x128xf32>
    %54 = vector.broadcast %53 : vector<1x128xf32> to vector<2x128xf32>
    %55 = arith.addf %52, %54 : vector<2x128xf32>
    %c0_41 = arith.constant 0 : index
    %c0_42 = arith.constant 0 : index
    %56 = vector.load %arg11[%c0_41, %c0_42] : memref<2x128xf32, #tpu.memory_space<vmem>>, vector<2x128xf32>
    tpu.vector_store %arg11[%c0_41, %c0_42], %55 {strides = array<i32>} : memref<2x128xf32, #tpu.memory_space<vmem>>, vector<2x128xf32>,
    return
  }
}

</mosaic_0001>

<llo_original>
// kernel: bart_twins_forward.1
$region0: #{bart_twins_forward.1}
  #allocation0 [shape = 'u32[]', space=smem, size = 0x4, offset = 0x4, fixed_abs, tag = 'smem constant byte address 0x4 - core index']
  #allocation1 [shape = 'u32[144,128]{1,0:T(1,128)}', space=vmem, size = 0x12000, scoped, tag = 'internal scratch']
  #allocation2 [shape = 'f32[16,32]{1,0:T(8,128)}', space=vmem, size = 0x2000, scoped, tag = 'scratch operand']
  %s0 = inlined_call_operand.vmem [shape: s32[2,2], index: 0, kind: input, shape index: {}]
  %s1 = inlined_call_operand.vmem [shape: f32[2,8,32], index: 1, kind: input, shape index: {}]
  %s2 = inlined_call_operand.vmem [shape: f32[2,8,32], index: 2, kind: input, shape index: {}]
  %s3 = inlined_call_operand.vmem [shape: f32[32,32], index: 3, kind: input, shape index: {}]
  %s4 = inlined_call_operand.vmem [shape: f32[1,32], index: 4, kind: input, shape index: {}]
  %s5 = inlined_call_operand.vmem [shape: f32[32,32], index: 5, kind: input, shape index: {}]
  %s6 = inlined_call_operand.vmem [shape: f32[1,32], index: 6, kind: input, shape index: {}]
  %s7 = inlined_call_operand.vmem [shape: f32[64,64], index: 7, kind: input, shape index: {}]
  %s8 = inlined_call_operand.vmem [shape: f32[1,64], index: 8, kind: input, shape index: {}]
  %s9 = inlined_call_operand.vmem [shape: f32[64,128], index: 9, kind: input, shape index: {}]
  %s10 = inlined_call_operand.vmem [shape: f32[1,128], index: 10, kind: input, shape index: {}]
  %s11 = inlined_call_operand.hbm [shape: f32[2,128], index: 11, kind: output, shape index: {}]
  %s12 = sld [smem:[#allocation0]]
  $region58: #{bart_twins_forward.1} parent=0
    _
  %s14 = ssub.s32 1, %s12
  %s15 = scalar_select 0, %s14, %s12
  $region1: #{bart_twins_forward.1} parent=0
    #allocation3 [shape = 'u8[1024]{0}', space=smem, size = 0x400, scoped, tag = 'input window, operand 0, single buffered']
    #allocation4 [shape = 's32[1]{0}', space=sflag, size = 0x4, scoped, tag = 'scoped memory for bart_twins_forward.1']
    #allocation5 [shape = 's32[1]{0}', space=sflag, size = 0x4, scoped, tag = 'scoped memory for bart_twins_forward.1']
    #allocation6 [shape = 'u8[1024]{0}', space=vmem, size = 0x400, scoped, tag = 'output window, operand 0, single buffered']
    %16 = vsyncpa [#allocation5], 0
    %17 = vsyncpa [#allocation4], 0
    // Predicated region
    $region2: #{bart_twins_forward.1} parent=1 // pred_check
      _
    $region3: #{bart_twins_forward.1} parent=1 // pred_check_branch
      %19 = sbr.rel (0) target = $region5
    $region4: #{bart_twins_forward.1} parent=1 // pred_region
      %s21 = ssub.s32 32, 32
      %22 = vsyncadd [#allocation5], %s21
      %s24 = sshll.u32 %s0, 4
      %s25 = int_to_ptr.vmem [resolvable:$true] %s24
      %27 = dma.vmem_to_smem %s25, 32, [#allocation3], [#allocation5]
    $region5: #{bart_twins_forward.1} parent=1 // pred_fallthru
      _
    // Predicated region
    $region6: #{bart_twins_forward.1} parent=1 // pred_check
      _
    $region7: #{bart_twins_forward.1} parent=1 // pred_check_branch
      %29 = sbr.rel (0) target = $region9
    $region8: #{bart_twins_forward.1} parent=1 // pred_region
      _
    $region9: #{bart_twins_forward.1} parent=1 // pred_fallthru
      _
    // Predicated region
    $region10: #{bart_twins_forward.1} parent=1 // pred_check
      _
    $region11: #{bart_twins_forward.1} parent=1 // pred_check_branch
      %31 = sbr.rel (0) target = $region13
    $region12: #{bart_twins_forward.1} parent=1 // pred_region
      _
    $region13: #{bart_twins_forward.1} parent=1 // pred_fallthru
      _
    // Predicated region
    $region14: #{bart_twins_forward.1} parent=1 // pred_check
      _
    $region15: #{bart_twins_forward.1} parent=1 // pred_check_branch
      %33 = sbr.rel (0) target = $region17
    $region16: #{bart_twins_forward.1} parent=1 // pred_region
      _
    $region17: #{bart_twins_forward.1} parent=1 // pred_fallthru
      _
    // Predicated region
    $region18: #{bart_twins_forward.1} parent=1 // pred_check
      _
    $region19: #{bart_twins_forward.1} parent=1 // pred_check_branch
      %35 = sbr.rel (0) target = $region21
    $region20: #{bart_twins_forward.1} parent=1 // pred_region
      _
    $region21: #{bart_twins_forward.1} parent=1 // pred_fallthru
      _
    // Predicated region
    $region22: #{bart_twins_forward.1} parent=1 // pred_check
      _
    $region23: #{bart_twins_forward.1} parent=1 // pred_check_branch
      %37 = sbr.rel (0) target = $region25
    $region24: #{bart_twins_forward.1} parent=1 // pred_region
      _
    $region25: #{bart_twins_forward.1} parent=1 // pred_fallthru
      _
    // Predicated region
    $region26: #{bart_twins_forward.1} parent=1 // pred_check
      _
    $region27: #{bart_twins_forward.1} parent=1 // pred_check_branch
      %39 = sbr.rel (0) target = $region29
    $region28: #{bart_twins_forward.1} parent=1 // pred_region
      _
    $region29: #{bart_twins_forward.1} parent=1 // pred_fallthru
      _
    // Predicated region
    $region30: #{bart_twins_forward.1} parent=1 // pred_check
      _
    $region31: #{bart_twins_forward.1} parent=1 // pred_check_branch
      %41 = sbr.rel (0) target = $region33
    $region32: #{bart_twins_forward.1} parent=1 // pred_region
      _
    $region33: #{bart_twins_forward.1} parent=1 // pred_fallthru
      _
    // Predicated region
    $region34: #{bart_twins_forward.1} parent=1 // pred_check
      _
    $region35: #{bart_twins_forward.1} parent=1 // pred_check_branch
      %43 = sbr.rel (0) target = $region37
    $region36: #{bart_twins_forward.1} parent=1 // pred_region
      _
    $region37: #{bart_twins_forward.1} parent=1 // pred_fallthru
      _
    // Predicated region
    $region38: #{bart_twins_forward.1} parent=1 // pred_check
      _
    $region39: #{bart_twins_forward.1} parent=1 // pred_check_branch
      %45 = sbr.rel (0) target = $region41
    $region40: #{bart_twins_forward.1} parent=1 // pred_region
      _
    $region41: #{bart_twins_forward.1} parent=1 // pred_fallthru
      _
    // Predicated region
    $region42: #{bart_twins_forward.1} parent=1 // pred_check
      _
    $region43: #{bart_twins_forward.1} parent=1 // pred_check_branch
      %47 = sbr.rel (0) target = $region45
    $region44: #{bart_twins_forward.1} parent=1 // pred_region
      _
    $region45: #{bart_twins_forward.1} parent=1 // pred_fallthru
      _
    // Predicated region
    $region46: #{bart_twins_forward.1} parent=1 // pred_check
      _
    $region47: #{bart_twins_forward.1} parent=1 // pred_check_branch
      %49 = sbr.rel (0) target = $region49
    $region48: #{bart_twins_forward.1} parent=1 // pred_region
      %50 = dma.done [#allocation5], 32
    $region49: #{bart_twins_forward.1} parent=1 // pred_fallthru
      _
    %51 = sfence
    %v53 = vld [vmem:[%s1] sm:$0xff]
    %v54 = vld [vmem:[%s1 + $0x8] sm:$0xff]
    %v55 = vpack.c.bf16 %v54, %v53
    %v56 = vld [vmem:[%s3] sm:$0xff]
    %v57 = vld [vmem:[%s3 + $0x8] sm:$0xff]
    %v58 = vld [vmem:[%s3 + $0x10] sm:$0xff]
    %v59 = vld [vmem:[%s3 + $0x18] sm:$0xff]
    %v60 = vpack.c.bf16 %v57, %v56
    %v61 = vpack.c.bf16 %v59, %v58
    %v62 = vld [vmem:[%s4] sm:$0x1]
    %v64 = vlaneseq
    %v65 = vshrl.u32 %v64, 7
    %v66 = vsub.s32 0, %v65
    %v67 = vrot.slane %v62, %v66
    %vm69 = vcmask 261120
    %v71 = vsel %vm69, %v55, 0
    %73 = vmatprep.subr.bf16.mxu0 0
    %74 = vmatpush1.bf16.msra.mxu0 %v60
    %75 = vmatprep.subr.bf16.mxu0 0
    %76 = vmatpush1.bf16.msra.mxu0 %v61
    %77 = vmatprep.subr.bf16.mxu0 0
    %78 = vmatpush1.bf16.msra.mxu0 0
    %79 = vmatprep.subr.bf16.mxu0 0
    %80 = vmatpush1.bf16.msra.mxu0 0
    %81 = vmatprep.subr.bf16.mxu0 0
    %82 = vmatpush1.bf16.msra.mxu0 0
    %83 = vmatprep.subr.bf16.mxu0 0
    %84 = vmatpush1.bf16.msra.mxu0 0
    %85 = vmatprep.subr.bf16.mxu0 0
    %86 = vmatpush1.bf16.msra.mxu0 0
    %87 = vmatprep.subr.bf16.mxu0 0
    %88 = vmatpush1.bf16.msra.mxu0 0
    %89 = vmatprep.subr.bf16.mxu0 0
    %90 = vmatpush1.bf16.msra.mxu0 0
    %91 = vmatprep.subr.bf16.mxu0 0
    %92 = vmatpush1.bf16.msra.mxu0 0
    %93 = vmatprep.subr.bf16.mxu0 0
    %94 = vmatpush1.bf16.msra.mxu0 0
    %95 = vmatprep.subr.bf16.mxu0 0
    %96 = vmatpush1.bf16.msra.mxu0 0
    %97 = vmatprep.subr.bf16.mxu0 0
    %98 = vmatpush1.bf16.msra.mxu0 0
    %99 = vmatprep.subr.bf16.mxu0 0
    %100 = vmatpush1.bf16.msra.mxu0 0
    %101 = vmatprep.subr.bf16.mxu0 0
    %102 = vmatpush1.bf16.msra.mxu0 0
    %103 = vmatprep.subr.bf16.mxu0 0
    %104 = vmatpush1.bf16.msra.mxu0 0
    %105 = vmatprep.mubr.bf16.mxu0 0
    %106 = vmatmul.mubr.bf16.gmra.mrb[0].mxu0 %v71
    %v107 = vpop.f32.mrb[0].mxu0
    %v108 = vadd.f32 %v67, %v107
    %v109 = vpop.f32.mrb[0].mxu0
    %v110 = vpop.f32.mrb[0].mxu0
    %v111 = vadd.f32 %v67, %v110
    %v112 = vpop.f32.mrb[0].mxu0
    %113 = vdwg.mxu0
    %v114 = vtanh.pop %v108
    %v115 = vtanh.pop %v111
    %116 = vst.msk [vmem:[#allocation2] sm:$0xff] %vm69, %v114
    %117 = vst.msk [vmem:[#allocation2 + $0x8] sm:$0xff] %vm69, %v115
    %s118 = sld [smem:[#allocation3]]
    %s119 = scalar_lea.vmem [#allocation2], %s118
    %v120 = vld [vmem:[%s119] sm:$0x1]
    %s121 = sld [smem:[#allocation3 + $0x1]]
    %s122 = sadd.s32 %s121, 8
    %s123 = scalar_lea.vmem [#allocation2], %s122
    %v124 = vld [vmem:[%s123] sm:$0x1]
    %v125 = vld [vmem:[%s2] sm:$0xff]
    %v126 = vld [vmem:[%s2 + $0x8] sm:$0xff]
    %v127 = vpack.c.bf16 %v126, %v125
    %v128 = vld [vmem:[%s5] sm:$0xff]
    %v129 = vld [vmem:[%s5 + $0x8] sm:$0xff]
    %v130 = vld [vmem:[%s5 + $0x10] sm:$0xff]
    %v131 = vld [vmem:[%s5 + $0x18] sm:$0xff]
    %v132 = vpack.c.bf16 %v129, %v128
    %v133 = vpack.c.bf16 %v131, %v130
    %v134 = vld [vmem:[%s6] sm:$0x1]
    %v136 = vlaneseq
    %v137 = vshrl.u32 %v136, 7
    %v138 = vsub.s32 0, %v137
    %v139 = vrot.slane %v134, %v138
    %v142 = vsel %vm69, %v127, 0
    %144 = vmatprep.subr.bf16.mxu0 0
    %145 = vmatpush1.bf16.msra.mxu0 %v132
    %146 = vmatprep.subr.bf16.mxu0 0
    %147 = vmatpush1.bf16.msra.mxu0 %v133
    %148 = vmatprep.subr.bf16.mxu0 0
    %149 = vmatpush1.bf16.msra.mxu0 0
    %150 = vmatprep.subr.bf16.mxu0 0
    %151 = vmatpush1.bf16.msra.mxu0 0
    %152 = vmatprep.subr.bf16.mxu0 0
    %153 = vmatpush1.bf16.msra.mxu0 0
    %154 = vmatprep.subr.bf16.mxu0 0
    %155 = vmatpush1.bf16.msra.mxu0 0
    %156 = vmatprep.subr.bf16.mxu0 0
    %157 = vmatpush1.bf16.msra.mxu0 0
    %158 = vmatprep.subr.bf16.mxu0 0
    %159 = vmatpush1.bf16.msra.mxu0 0
    %160 = vmatprep.subr.bf16.mxu0 0
    %161 = vmatpush1.bf16.msra.mxu0 0
    %162 = vmatprep.subr.bf16.mxu0 0
    %163 = vmatpush1.bf16.msra.mxu0 0
    %164 = vmatprep.subr.bf16.mxu0 0
    %165 = vmatpush1.bf16.msra.mxu0 0
    %166 = vmatprep.subr.bf16.mxu0 0
    %167 = vmatpush1.bf16.msra.mxu0 0
    %168 = vmatprep.subr.bf16.mxu0 0
    %169 = vmatpush1.bf16.msra.mxu0 0
    %170 = vmatprep.subr.bf16.mxu0 0
    %171 = vmatpush1.bf16.msra.mxu0 0
    %172 = vmatprep.subr.bf16.mxu0 0
    %173 = vmatpush1.bf16.msra.mxu0 0
    %174 = vmatprep.subr.bf16.mxu0 0
    %175 = vmatpush1.bf16.msra.mxu0 0
    %176 = vmatprep.mubr.bf16.mxu0 0
    %177 = vmatmul.mubr.bf16.gmra.mrb[0].mxu0 %v142
    %v178 = vpop.f32.mrb[0].mxu0
    %v179 = vadd.f32 %v139, %v178
    %v180 = vpop.f32.mrb[0].mxu0
    %v181 = vpop.f32.mrb[0].mxu0
    %v182 = vadd.f32 %v139, %v181
    %v183 = vpop.f32.mrb[0].mxu0
    %184 = vdwg.mxu0
    %v185 = vtanh.pop %v179
    %v186 = vtanh.pop %v182
    %187 = vst.msk [vmem:[#allocation2] sm:$0xff] %vm69, %v185
    %188 = vst.msk [vmem:[#allocation2 + $0x8] sm:$0xff] %vm69, %v186
    %s189 = sld [smem:[#allocation3 + $0x80]]
    %s190 = scalar_lea.vmem [#allocation2], %s189
    %v191 = vld [vmem:[%s190] sm:$0x1]
    %s192 = sld [smem:[#allocation3 + $0x81]]
    %s193 = sadd.s32 %s192, 8
    %s194 = scalar_lea.vmem [#allocation2], %s193
    %v195 = vld [vmem:[%s194] sm:$0x1]
    %197 = vrot.lane.b32.xlu0 %v124, 32
    %v198 = vpop.permute.xlu0 %197
    %v200 = vsel %vm69, %v120, %v198
    %202 = vrot.lane.b32.xlu0 %v195, 32
    %v203 = vpop.permute.xlu0 %202
    %v205 = vsel %vm69, %v191, %v203
    %v207 = vrot.slane %v205, 7
    %vm209 = vcmask 1040384
    %v210 = vsel %vm209, %v200, %v207
    %v211 = vpack.c.bf16 %v210, %v210
    %v212 = vld [vmem:[%s7] sm:$0xff]
    %v213 = vld [vmem:[%s7 + $0x8] sm:$0xff]
    %v214 = vld [vmem:[%s7 + $0x10] sm:$0xff]
    %v215 = vld [vmem:[%s7 + $0x18] sm:$0xff]
    %v216 = vld [vmem:[%s7 + $0x20] sm:$0xff]
    %v217 = vld [vmem:[%s7 + $0x28] sm:$0xff]
    %v218 = vld [vmem:[%s7 + $0x30] sm:$0xff]
    %v219 = vld [vmem:[%s7 + $0x38] sm:$0xff]
    %v220 = vpack.c.bf16 %v213, %v212
    %v221 = vpack.c.bf16 %v215, %v214
    %v222 = vpack.c.bf16 %v217, %v216
    %v223 = vpack.c.bf16 %v219, %v218
    %v224 = vld [vmem:[%s8] sm:$0x1]
    %v226 = vlaneseq
    %v227 = vshrl.u32 %v226, 7
    %v228 = vsub.s32 0, %v227
    %v229 = vrot.slane %v224, %v228
    %vm231 = vcmask 523264
    %v233 = vsel %vm231, %v211, 0
    %235 = vmatprep.subr.bf16.mxu0 0
    %236 = vmatpush1.bf16.msra.mxu0 %v220
    %237 = vmatprep.subr.bf16.mxu0 0
    %238 = vmatpush1.bf16.msra.mxu0 %v221
    %239 = vmatprep.subr.bf16.mxu0 0
    %240 = vmatpush1.bf16.msra.mxu0 %v222
    %241 = vmatprep.subr.bf16.mxu0 0
    %242 = vmatpush1.bf16.msra.mxu0 %v223
    %243 = vmatprep.subr.bf16.mxu0 0
    %244 = vmatpush1.bf16.msra.mxu0 0
    %245 = vmatprep.subr.bf16.mxu0 0
    %246 = vmatpush1.bf16.msra.mxu0 0
    %247 = vmatprep.subr.bf16.mxu0 0
    %248 = vmatpush1.bf16.msra.mxu0 0
    %249 = vmatprep.subr.bf16.mxu0 0
    %250 = vmatpush1.bf16.msra.mxu0 0
    %251 = vmatprep.subr.bf16.mxu0 0
    %252 = vmatpush1.bf16.msra.mxu0 0
    %253 = vmatprep.subr.bf16.mxu0 0
    %254 = vmatpush1.bf16.msra.mxu0 0
    %255 = vmatprep.subr.bf16.mxu0 0
    %256 = vmatpush1.bf16.msra.mxu0 0
    %257 = vmatprep.subr.bf16.mxu0 0
    %258 = vmatpush1.bf16.msra.mxu0 0
    %259 = vmatprep.subr.bf16.mxu0 0
    %260 = vmatpush1.bf16.msra.mxu0 0
    %261 = vmatprep.subr.bf16.mxu0 0
    %262 = vmatpush1.bf16.msra.mxu0 0
    %263 = vmatprep.subr.bf16.mxu0 0
    %264 = vmatpush1.bf16.msra.mxu0 0
    %265 = vmatprep.subr.bf16.mxu0 0
    %266 = vmatpush1.bf16.msra.mxu0 0
    %267 = vmatprep.mubr.bf16.mxu0 0
    %268 = vmatmul.mubr.bf16.gmra.mrb[0].mxu0 %v233
    %v269 = vpop.f32.mrb[0].mxu0
    %v270 = vadd.f32 %v229, %v269
    %v271 = vpop.f32.mrb[0].mxu0
    %v272 = vpop.f32.mrb[0].mxu0
    %v273 = vpop.f32.mrb[0].mxu0
    %274 = vdwg.mxu0
    %v275 = vtanh.pop %v270
    %v276 = vpack.c.bf16 %v275, %v275
    %v277 = vld [vmem:[%s9] sm:$0xff]
    %v278 = vld [vmem:[%s9 + $0x8] sm:$0xff]
    %v279 = vld [vmem:[%s9 + $0x10] sm:$0xff]
    %v280 = vld [vmem:[%s9 + $0x18] sm:$0xff]
    %v281 = vld [vmem:[%s9 + $0x20] sm:$0xff]
    %v282 = vld [vmem:[%s9 + $0x28] sm:$0xff]
    %v283 = vld [vmem:[%s9 + $0x30] sm:$0xff]
    %v284 = vld [vmem:[%s9 + $0x38] sm:$0xff]
    %v285 = vpack.c.bf16 %v278, %v277
    %v286 = vpack.c.bf16 %v280, %v279
    %v287 = vpack.c.bf16 %v282, %v281
    %v288 = vpack.c.bf16 %v284, %v283
    %v289 = vld [vmem:[%s10] sm:$0x1]
    %v291 = vlaneseq
    %v292 = vshrl.u32 %v291, 7
    %v293 = vsub.s32 0, %v292
    %v294 = vrot.slane %v289, %v293
    %v297 = vsel %vm231, %v276, 0
    %299 = vmatprep.subr.bf16.mxu0 0
    %300 = vmatpush1.bf16.msra.mxu0 %v285
    %301 = vmatprep.subr.bf16.mxu0 0
    %302 = vmatpush1.bf16.msra.mxu0 %v286
    %303 = vmatprep.subr.bf16.mxu0 0
    %304 = vmatpush1.bf16.msra.mxu0 %v287
    %305 = vmatprep.subr.bf16.mxu0 0
    %306 = vmatpush1.bf16.msra.mxu0 %v288
    %307 = vmatprep.subr.bf16.mxu0 0
    %308 = vmatpush1.bf16.msra.mxu0 0
    %309 = vmatprep.subr.bf16.mxu0 0
    %310 = vmatpush1.bf16.msra.mxu0 0
    %311 = vmatprep.subr.bf16.mxu0 0
    %312 = vmatpush1.bf16.msra.mxu0 0
    %313 = vmatprep.subr.bf16.mxu0 0
    %314 = vmatpush1.bf16.msra.mxu0 0
    %315 = vmatprep.subr.bf16.mxu0 0
    %316 = vmatpush1.bf16.msra.mxu0 0
    %317 = vmatprep.subr.bf16.mxu0 0
    %318 = vmatpush1.bf16.msra.mxu0 0
    %319 = vmatprep.subr.bf16.mxu0 0
    %320 = vmatpush1.bf16.msra.mxu0 0
    %321 = vmatprep.subr.bf16.mxu0 0
    %322 = vmatpush1.bf16.msra.mxu0 0
    %323 = vmatprep.subr.bf16.mxu0 0
    %324 = vmatpush1.bf16.msra.mxu0 0
    %325 = vmatprep.subr.bf16.mxu0 0
    %326 = vmatpush1.bf16.msra.mxu0 0
    %327 = vmatprep.subr.bf16.mxu0 0
    %328 = vmatpush1.bf16.msra.mxu0 0
    %329 = vmatprep.subr.bf16.mxu0 0
    %330 = vmatpush1.bf16.msra.mxu0 0
    %331 = vmatprep.mubr.bf16.mxu0 0
    %332 = vmatmul.mubr.bf16.gmra.mrb[0].mxu0 %v297
    %v333 = vpop.f32.mrb[0].mxu0
    %v334 = vadd.f32 %v294, %v333
    %v335 = vpop.f32.mrb[0].mxu0
    %v336 = vpop.f32.mrb[0].mxu0
    %v337 = vpop.f32.mrb[0].mxu0
    %338 = vdwg.mxu0
    %339 = vst [vmem:[#allocation6] sm:$0x3] %v334
    // Predicated region
    $region50: #{bart_twins_forward.1} parent=1 // pred_check
      _
    $region51: #{bart_twins_forward.1} parent=1 // pred_check_branch
      %341 = sbr.rel (0) target = $region53
    $region52: #{bart_twins_forward.1} parent=1 // pred_region
      %s343 = ssub.s32 32, 32
      %344 = vsyncadd [#allocation4], %s343
      %s346 = sshll.u32 [#allocation6], 4
      %s347 = int_to_ptr.vmem [resolvable:$true] %s346
      %349 = dma.vmem_to_hbm [thread:$0]  %s347, 32, %s11, [#allocation4]
    $region53: #{bart_twins_forward.1} parent=1 // pred_fallthru
      _
    // Predicated region
    $region54: #{bart_twins_forward.1} parent=1 // pred_check
      _
    $region55: #{bart_twins_forward.1} parent=1 // pred_check_branch
      %351 = sbr.rel (0) target = $region57
    $region56: #{bart_twins_forward.1} parent=1 // pred_region
      %352 = dma.done [#allocation4], 32
    $region57: #{bart_twins_forward.1} parent=1 // pred_fallthru
      _
    %353 = vsyncpa [#allocation4], 1
    %354 = vsyncpa [#allocation5], 1

</llo_original>
